<compile_context>
chip_gen: v7x
topology: tpu7x:2x2x1
jax: 0.10.0
libtpu: 0.0.40
codegen_flags: <defaults>
</compile_context>

<pallas_src>
import functools

import jax
import jax.numpy as jnp
import numpy as np
from jax.experimental import pallas as pl
from jax.experimental.pallas import tpu as pltpu


# ---------------------------------------------------------------------------
# Kernel A: projection + (z, BN-moment) accumulation over L tiles + GCN
# ---------------------------------------------------------------------------
def proj_gcn_stats_kernel(x_ref, wp_ref, bp_ref, w1t_ref, b1_ref, w2_ref,
                          g_ref, bsum_ref, bsq_ref,
                          z_acc, s_acc, m_acc, *, l_true, l_tile):
    l = pl.program_id(1)
    num_l = pl.num_programs(1)

    x = x_ref[0].astype(jnp.bfloat16)                               # (C, tL)

    # conv_proj (1x1x1 conv) == channel matmul: proj = Wp @ x + bp  -> (Nn, tL)
    proj_f32 = (jnp.dot(wp_ref[...], x, preferred_element_type=jnp.float32)
                + bp_ref[...])
    proj_bf = proj_f32.astype(jnp.bfloat16)

    # partial z = x @ proj^T: contract the lane (tL) dims directly.
    # NOTE(perf): verify via bundle dump that this does not emit a per-tile
    # vxpose of proj; if it does, switch to the explicit trans_b matmul path.
    z_part = jax.lax.dot_general(
        x, proj_bf, dimension_numbers=(((1,), (1,)), ((), ())),
        preferred_element_type=jnp.float32)                         # (C, Nn)

    # BN-moment helpers of proj. Padded spatial columns equal bp (not zero,
    # because of the bias) so they must be masked out of the statistics.
    if l_true % l_tile != 0:
        col = jax.lax.broadcasted_iota(jnp.int32, proj_f32.shape, 1)
        valid = (col + l * l_tile) < l_true
        proj_stat = jnp.where(valid, proj_f32, 0.0)
    else:
        proj_stat = proj_f32
    s_part = jnp.sum(proj_stat, axis=-1, keepdims=True)             # (Nn, 1)
    m_part = jax.lax.dot_general(
        proj_stat, proj_stat, dimension_numbers=(((1,), (1,)), ((), ())),
        preferred_element_type=jnp.float32)                         # (Nn, Nn)

    @pl.when(l == 0)
    def _():
        z_acc[...] = jnp.zeros_like(z_acc)
        s_acc[...] = jnp.zeros_like(s_acc)
        m_acc[...] = jnp.zeros_like(m_acc)

    z_acc[...] += z_part
    s_acc[...] += s_part
    m_acc[...] += m_part

    # On the final L tile run the (tiny) GCN and emit g + per-batch BN moments.
    @pl.when(l == num_l - 1)
    def _():
        z = z_acc[...]                                              # (C, Nn) f32
        zb = z.astype(jnp.bfloat16)
        # GCN.conv1 over the node dim (+ bias), residual, relu.
        h = (jnp.dot(zb, w1t_ref[...], preferred_element_type=jnp.float32)
             + b1_ref[...])
        h = jnp.maximum(h + z, 0.0)
        # GCN.conv2 over the state/channel dim (no bias).
        g = jnp.dot(w2_ref[...], h.astype(jnp.bfloat16),
                    preferred_element_type=jnp.float32)             # (C, Nn)
        g_ref[0] = g.astype(jnp.bfloat16)

        # BN moments of xs = g @ proj without materializing xs:
        #   sum_l xs[c,l]   = g[c,:] . s
        #   sum_l xs[c,l]^2 = g[c,:] M g[c,:]^T
        bsum_ref[0] = jnp.dot(g, s_acc[...], preferred_element_type=jnp.float32)
        gm = jnp.dot(g, m_acc[...], preferred_element_type=jnp.float32)
        bsq_ref[0] = jnp.sum(gm * g, axis=-1, keepdims=True)


# ---------------------------------------------------------------------------
# Kernel C: recompute proj and xs = g @ proj per tile, BN apply + residual add
# ---------------------------------------------------------------------------
def backproj_apply_kernel(x_ref, wp_ref, bp_ref, g_ref, scale_ref, shift_ref,
                          o_ref):
    x = x_ref[0]                                                    # (C, tL) f32
    xb = x.astype(jnp.bfloat16)
    proj = (jnp.dot(wp_ref[...], xb, preferred_element_type=jnp.float32)
            + bp_ref[...]).astype(jnp.bfloat16)                     # (Nn, tL)
    xs = jnp.dot(g_ref[0], proj, preferred_element_type=jnp.float32)  # (C, tL)
    o_ref[0] = x + xs * scale_ref[...] + shift_ref[...]


def _round_up(v, m):
    return ((v + m - 1) // m) * m


def _choose_l_tile(L, l_tile=None, target=1024):
    """Pick a lane-dense (multiple-of-128) L tile; pad L if it doesn't divide."""
    if l_tile is None:
        if L % 128 == 0:
            t = min((target // 128) * 128, L)
            while t >= 128 and L % t != 0:
                t -= 128
            l_tile = max(t, 128)           # 128 always divides here
        else:
            l_tile = min((target // 128) * 128, _round_up(L, 128))
    else:
        assert l_tile % 128 == 0, "l_tile must be a multiple of 128"
    L_pad = _round_up(L, l_tile)
    return l_tile, L_pad


# ---------------------------------------------------------------------------
# Wrapper
# ---------------------------------------------------------------------------
def glore_unit_forward(x, params, *, eps=1e-4, l_tile=None):
    """x: (N, C, D, H, W) float32; params: dict of weights (see make_params)."""
    n, C, D, H, W = x.shape
    L = D * H * W
    x_flat = x.reshape(n, C, L)

    tL, L_pad = _choose_l_tile(L, l_tile)
    nL = L_pad // tL
    if L_pad != L:
        # Zero-pad the spatial dim to a tile multiple (padded columns are
        # masked out of the BN statistics and sliced off the output).
        x_flat = jnp.pad(x_flat, ((0, 0), (0, 0), (0, L_pad - L)))

    Wp = params["conv_proj_w"]          # (Nn, C)
    bp = params["conv_proj_b"]          # (Nn,)
    W1 = params["gcn_conv1_w"]          # (Nn, Nn)
    b1 = params["gcn_conv1_b"]          # (Nn,)
    W2 = params["gcn_conv2_w"]          # (C, C)
    gamma = params["bn_gamma"]          # (C,)
    beta = params["bn_beta"]            # (C,)
    Nn = Wp.shape[0]

    # Node dim padded only to the bf16 sublane granularity (16), NOT 128:
    # proj never touches HBM anymore, so 128-padding would only inflate the
    # on-chip z/h/g tiles.  Zero padding is exactly semantics-preserving
    # (padded proj rows / z, h, g columns are all 0).
    Nn_p = max(_round_up(Nn, 16), 16)
    wp_p = jnp.zeros((Nn_p, C), jnp.bfloat16).at[:Nn].set(Wp.astype(jnp.bfloat16))
    bp_p = jnp.zeros((Nn_p, 1), jnp.float32).at[:Nn, 0].set(bp)
    w1t_p = jnp.zeros((Nn_p, Nn_p), jnp.bfloat16).at[:Nn, :Nn].set(
        W1.T.astype(jnp.bfloat16))
    b1_p = jnp.zeros((1, Nn_p), jnp.float32).at[0, :Nn].set(b1)
    w2_bf = W2.astype(jnp.bfloat16)

    # ---- Kernel A: proj (on-chip) + z / BN-moment accumulation + GCN --------
    kern_a = functools.partial(proj_gcn_stats_kernel, l_true=L, l_tile=tL)
    g, bsum, bsq = pl.pallas_call(
        kern_a,
        out_shape=(
            jax.ShapeDtypeStruct((n, C, Nn_p), jnp.bfloat16),
            jax.ShapeDtypeStruct((n, C, 1), jnp.float32),
            jax.ShapeDtypeStruct((n, C, 1), jnp.float32),
        ),
        grid_spec=pltpu.PrefetchScalarGridSpec(
            num_scalar_prefetch=0,
            grid=(n, nL),
            in_specs=[
                pl.BlockSpec((1, C, tL), lambda b, l: (b, 0, l)),
                pl.BlockSpec((Nn_p, C), lambda b, l: (0, 0)),
                pl.BlockSpec((Nn_p, 1), lambda b, l: (0, 0)),
                pl.BlockSpec((Nn_p, Nn_p), lambda b, l: (0, 0)),
                pl.BlockSpec((1, Nn_p), lambda b, l: (0, 0)),
                pl.BlockSpec((C, C), lambda b, l: (0, 0)),
            ],
            out_specs=[
                pl.BlockSpec((1, C, Nn_p), lambda b, l: (b, 0, 0)),
                pl.BlockSpec((1, C, 1), lambda b, l: (b, 0, 0)),
                pl.BlockSpec((1, C, 1), lambda b, l: (b, 0, 0)),
            ],
            scratch_shapes=[
                pltpu.VMEM((C, Nn_p), jnp.float32),     # z accumulator
                pltpu.VMEM((Nn_p, 1), jnp.float32),     # sum_l proj
                pltpu.VMEM((Nn_p, Nn_p), jnp.float32),  # proj @ proj^T
            ],
        ),
        compiler_params=pltpu.CompilerParams(
            dimension_semantics=("parallel", "arbitrary")),
    )(x_flat, wp_p, bp_p, w1t_p, b1_p, w2_bf)

    # ---- O(C) glue: training-mode (biased) batch stats -> scale / shift -----
    cnt = jnp.float32(n * L)                      # true count (padding excluded)
    mean = jnp.sum(bsum, axis=0)[:, 0] / cnt
    ex2 = jnp.sum(bsq, axis=0)[:, 0] / cnt
    var = jnp.maximum(ex2 - mean * mean, 0.0)
    inv = jax.lax.rsqrt(var + eps)
    scale = (gamma * inv).reshape(C, 1).astype(jnp.float32)
    shift = (beta - gamma * inv * mean).reshape(C, 1).astype(jnp.float32)

    # ---- Kernel C: recompute proj & xs, out = x + scale*xs + shift ----------
    out = pl.pallas_call(
        backproj_apply_kernel,
        out_shape=jax.ShapeDtypeStruct((n, C, L_pad), jnp.float32),
        grid_spec=pltpu.PrefetchScalarGridSpec(
            num_scalar_prefetch=0,
            grid=(n, nL),
            in_specs=[
                pl.BlockSpec((1, C, tL), lambda b, l: (b, 0, l)),
                pl.BlockSpec((Nn_p, C), lambda b, l: (0, 0)),
                pl.BlockSpec((Nn_p, 1), lambda b, l: (0, 0)),
                pl.BlockSpec((1, C, Nn_p), lambda b, l: (b, 0, 0)),
                pl.BlockSpec((C, 1), lambda b, l: (0, 0)),
                pl.BlockSpec((C, 1), lambda b, l: (0, 0)),
            ],
            out_specs=pl.BlockSpec((1, C, tL), lambda b, l: (b, 0, l)),
        ),
        compiler_params=pltpu.CompilerParams(
            dimension_semantics=("parallel", "parallel")),
    )(x_flat, wp_p, bp_p, g, scale, shift)

    if L_pad != L:
        out = out[:, :, :L]
    return out.reshape(n, C, D, H, W)


# ---------------------------------------------------------------------------
# Pure-JAX f32 reference (matches the PyTorch module in training mode)
# ---------------------------------------------------------------------------
def glore_unit_reference(x, params, *, eps=1e-4):
    n, C, D, H, W = x.shape
    L = D * H * W
    xf = x.reshape(n, C, L)
    Wp, bp = params["conv_proj_w"], params["conv_proj_b"]
    W1, b1 = params["gcn_conv1_w"], params["gcn_conv1_b"]
    W2 = params["gcn_conv2_w"]
    gamma, beta = params["bn_gamma"], params["bn_beta"]

    hp = "highest"
    proj = jnp.einsum("jc,bcl->bjl", Wp, xf, precision=hp) + bp[None, :, None]
    z = jnp.einsum("bcl,bjl->bcj", xf, proj, precision=hp)
    h = jnp.einsum("bci,ji->bcj", z, W1, precision=hp) + b1[None, None, :]
    h = jnp.maximum(h + z, 0.0)
    g = jnp.einsum("dc,bcj->bdj", W2, h, precision=hp)
    xs = jnp.einsum("bcj,bjl->bcl", g, proj, precision=hp)

    mean = xs.mean(axis=(0, 2), keepdims=True)
    var = ((xs - mean) ** 2).mean(axis=(0, 2), keepdims=True)
    xhat = (xs - mean) / jnp.sqrt(var + eps)
    out = xf + gamma[None, :, None] * xhat + beta[None, :, None]
    return out.reshape(x.shape)


# ---------------------------------------------------------------------------
# Deterministic parameter construction + demo
# ---------------------------------------------------------------------------
def make_params(key, num_features, num_nodes):
    ks = jax.random.split(key, 6)
    s = 0.1
    return {
        "conv_proj_w": s * jax.random.normal(ks[0], (num_nodes, num_features), jnp.float32),
        "conv_proj_b": s * jax.random.normal(ks[1], (num_nodes,), jnp.float32),
        "gcn_conv1_w": s * jax.random.normal(ks[2], (num_nodes, num_nodes), jnp.float32),
        "gcn_conv1_b": s * jax.random.normal(ks[3], (num_nodes,), jnp.float32),
        "gcn_conv2_w": s * jax.random.normal(ks[4], (num_features, num_features), jnp.float32),
        # PyTorch BatchNorm3d default init: weight=1, bias=0
        "bn_gamma": jnp.ones((num_features,), jnp.float32),
        "bn_beta": jnp.zeros((num_features,), jnp.float32),
    }


if __name__ == "__main__":
    key = jax.random.PRNGKey(0)
    k_x, k_p = jax.random.split(key)

    batch, num_features, num_nodes = 2, 8, 4
    D, H, W = 4, 8, 6   # L = 192: with tL=128 this exercises BOTH the multi-tile
                        # z / BN-moment reduction AND the L-padding + masking path.

    x = jax.random.normal(k_x, (batch, num_features, D, H, W), jnp.float32)
    params = make_params(k_p, num_features, num_nodes)

    out = glore_unit_forward(x, params, l_tile=128)
    out = jax.block_until_ready(out)

    ref = jax.block_until_ready(glore_unit_reference(x, params))
    # bf16 matmul operands (with f32 accumulation) => slightly loosened tolerance
    # vs the pure-f32 reference.
    np.testing.assert_allclose(np.asarray(out), np.asarray(ref), rtol=5e-2, atol=5e-2)

    print("KERNEL_OK")
</pallas_src>

<mosaic_0001>
module attributes {stable_mosaic.version = 11 : i64} {
  func.func @proj_gcn_stats_kernel(%arg0: i32, %arg1: i32, %arg2: memref<1x8x128xf32, #tpu.memory_space<vmem>>, %arg3: memref<16x8xbf16, #tpu.memory_space<vmem>>, %arg4: memref<16x1xf32, #tpu.memory_space<vmem>>, %arg5: memref<16x16xbf16, #tpu.memory_space<vmem>>, %arg6: memref<1x16xf32, #tpu.memory_space<vmem>>, %arg7: memref<8x8xbf16, #tpu.memory_space<vmem>>, %arg8: memref<1x8x16xbf16, #tpu.memory_space<vmem>>, %arg9: memref<1x8x1xf32, #tpu.memory_space<vmem>>, %arg10: memref<1x8x1xf32, #tpu.memory_space<vmem>>, %arg11: memref<8x16xf32, #tpu.memory_space<vmem>>, %arg12: memref<16x1xf32, #tpu.memory_space<vmem>>, %arg13: memref<16x16xf32, #tpu.memory_space<vmem>>) attributes {dimension_semantics = [#tpu.dimension_semantics<parallel>, #tpu.dimension_semantics<arbitrary>], iteration_bounds = array<i64: 2, 2>, scalar_prefetch = 0 : i64, scratch_operands = 3 : i64, tpu.core_type = #tpu.core_type<tc>, window_params = [{transform_indices = @transform_0, window_bounds = array<i64: 1, 8, 128>}, {pipeline_mode = #tpu.pipeline_mode<synchronous>, transform_indices = @transform_1, window_bounds = array<i64: 16, 8>}, {pipeline_mode = #tpu.pipeline_mode<synchronous>, transform_indices = @transform_2, window_bounds = array<i64: 16, 1>}, {pipeline_mode = #tpu.pipeline_mode<synchronous>, transform_indices = @transform_3, window_bounds = array<i64: 16, 16>}, {pipeline_mode = #tpu.pipeline_mode<synchronous>, transform_indices = @transform_4, window_bounds = array<i64: 1, 16>}, {pipeline_mode = #tpu.pipeline_mode<synchronous>, transform_indices = @transform_5, window_bounds = array<i64: 8, 8>}, {transform_indices = @transform_6, window_bounds = array<i64: 1, 8, 16>}, {transform_indices = @transform_7, window_bounds = array<i64: 1, 8, 1>}, {transform_indices = @transform_8, window_bounds = array<i64: 1, 8, 1>}]} {
    %c0 = arith.constant 0 : index
    %c0_0 = arith.constant 0 : index
    %c0_1 = arith.constant 0 : index
    %0 = vector.load %arg2[%c0, %c0_0, %c0_1] : memref<1x8x128xf32, #tpu.memory_space<vmem>>, vector<1x8x128xf32>
    %1 = vector.shape_cast %0 : vector<1x8x128xf32> to vector<8x128xf32>
    %2 = arith.truncf %1 : vector<8x128xf32> to vector<8x128xbf16>
    %c0_2 = arith.constant 0 : index
    %c0_3 = arith.constant 0 : index
    %3 = vector.load %arg3[%c0_2, %c0_3] : memref<16x8xbf16, #tpu.memory_space<vmem>>, vector<16x8xbf16>
    %cst = arith.constant dense<0.000000e+00> : vector<16x128xf32>
    %4 = tpu.matmul %3, %2, %cst {dimension_numbers = #tpu.dot_dimension_numbers<[1], [0], [0], [1], [0, 0, 1, 1], [], []>} : vector<16x8xbf16>, vector<8x128xbf16>, vector<16x128xf32> -> vector<16x128xf32>
    %c0_4 = arith.constant 0 : index
    %c0_5 = arith.constant 0 : index
    %5 = vector.load %arg4[%c0_4, %c0_5] : memref<16x1xf32, #tpu.memory_space<vmem>>, vector<16x1xf32>
    %6 = vector.broadcast %5 : vector<16x1xf32> to vector<16x128xf32>
    %7 = arith.addf %4, %6 : vector<16x128xf32>
    %8 = arith.truncf %7 : vector<16x128xf32> to vector<16x128xbf16>
    %cst_6 = arith.constant dense<0.000000e+00> : vector<8x16xf32>
    %9 = tpu.matmul %2, %8, %cst_6 {dimension_numbers = #tpu.dot_dimension_numbers<[1], [1], [0], [0], [0, 0, 1, 0], [], []>} : vector<8x128xbf16>, vector<16x128xbf16>, vector<8x16xf32> -> vector<8x16xf32>
    %10 = tpu.iota {dimensions = array<i32: 1>} : vector<16x128xi32>
    %c128_i32 = arith.constant 128 : i32
    %11 = arith.muli %arg1, %c128_i32 : i32
    %12 = vector.broadcast %11 : i32 to vector<16x128xi32>
    %13 = arith.addi %10, %12 : vector<16x128xi32>
    %c192_i32 = arith.constant 192 : i32
    %14 = vector.broadcast %c192_i32 : i32 to vector<16x128xi32>
    %15 = arith.cmpi slt, %13, %14 : vector<16x128xi32>
    %cst_7 = arith.constant 0.000000e+00 : f32
    %16 = vector.broadcast %cst_7 : f32 to vector<16x128xf32>
    %17 = arith.select %15, %7, %16 : vector<16x128xi1>, vector<16x128xf32>
    %cst_8 = arith.constant dense<0.000000e+00> : vector<16xf32>
    %18 = vector.multi_reduction <add>, %17, %cst_8 [1] : vector<16x128xf32> to vector<16xf32>
    %19 = vector.shape_cast %18 : vector<16xf32> to vector<16x1xf32>
    %cst_9 = arith.constant dense<0.000000e+00> : vector<16x16xf32>
    %20 = tpu.matmul %17, %17, %cst_9 {dimension_numbers = #tpu.dot_dimension_numbers<[1], [1], [0], [0], [0, 0, 1, 0], [], []>} : vector<16x128xf32>, vector<16x128xf32>, vector<16x16xf32> -> vector<16x16xf32>
    %c0_i32 = arith.constant 0 : i32
    %21 = arith.cmpi eq, %arg1, %c0_i32 : i32
    %22 = arith.extui %21 : i1 to i32
    %c0_i32_10 = arith.constant 0 : i32
    %23 = arith.cmpi ne, %22, %c0_i32_10 : i32
    scf.if %23 {
      %cst_24 = arith.constant 0.000000e+00 : f32
      %36 = vector.broadcast %cst_24 : f32 to vector<8x16xf32>
      %c0_25 = arith.constant 0 : index
      %c0_26 = arith.constant 0 : index
      %37 = vector.load %arg11[%c0_25, %c0_26] : memref<8x16xf32, #tpu.memory_space<vmem>>, vector<8x16xf32>
      tpu.vector_store %arg11[%c0_25, %c0_26], %36 {strides = array<i32>} : memref<8x16xf32, #tpu.memory_space<vmem>>, vector<8x16xf32>,
      %cst_27 = arith.constant 0.000000e+00 : f32
      %38 = vector.broadcast %cst_27 : f32 to vector<16x1xf32>
      %c0_28 = arith.constant 0 : index
      %c0_29 = arith.constant 0 : index
      %39 = vector.load %arg12[%c0_28, %c0_29] : memref<16x1xf32, #tpu.memory_space<vmem>>, vector<16x1xf32>
      tpu.vector_store %arg12[%c0_28, %c0_29], %38 {strides = array<i32>} : memref<16x1xf32, #tpu.memory_space<vmem>>, vector<16x1xf32>,
      %cst_30 = arith.constant 0.000000e+00 : f32
      %40 = vector.broadcast %cst_30 : f32 to vector<16x16xf32>
      %c0_31 = arith.constant 0 : index
      %c0_32 = arith.constant 0 : index
      %41 = vector.load %arg13[%c0_31, %c0_32] : memref<16x16xf32, #tpu.memory_space<vmem>>, vector<16x16xf32>
      tpu.vector_store %arg13[%c0_31, %c0_32], %40 {strides = array<i32>} : memref<16x16xf32, #tpu.memory_space<vmem>>, vector<16x16xf32>,
    } else {
    }
    %c0_11 = arith.constant 0 : index
    %c0_12 = arith.constant 0 : index
    %24 = vector.load %arg11[%c0_11, %c0_12] : memref<8x16xf32, #tpu.memory_space<vmem>>, vector<8x16xf32>
    %25 = arith.addf %24, %9 : vector<8x16xf32>
    %c0_13 = arith.constant 0 : index
    %c0_14 = arith.constant 0 : index
    %26 = vector.load %arg11[%c0_13, %c0_14] : memref<8x16xf32, #tpu.memory_space<vmem>>, vector<8x16xf32>
    tpu.vector_store %arg11[%c0_13, %c0_14], %25 {strides = array<i32>} : memref<8x16xf32, #tpu.memory_space<vmem>>, vector<8x16xf32>,
    %c0_15 = arith.constant 0 : index
    %c0_16 = arith.constant 0 : index
    %27 = vector.load %arg12[%c0_15, %c0_16] : memref<16x1xf32, #tpu.memory_space<vmem>>, vector<16x1xf32>
    %28 = arith.addf %27, %19 : vector<16x1xf32>
    %c0_17 = arith.constant 0 : index
    %c0_18 = arith.constant 0 : index
    %29 = vector.load %arg12[%c0_17, %c0_18] : memref<16x1xf32, #tpu.memory_space<vmem>>, vector<16x1xf32>
    tpu.vector_store %arg12[%c0_17, %c0_18], %28 {strides = array<i32>} : memref<16x1xf32, #tpu.memory_space<vmem>>, vector<16x1xf32>,
    %c0_19 = arith.constant 0 : index
    %c0_20 = arith.constant 0 : index
    %30 = vector.load %arg13[%c0_19, %c0_20] : memref<16x16xf32, #tpu.memory_space<vmem>>, vector<16x16xf32>
    %31 = arith.addf %30, %20 : vector<16x16xf32>
    %c0_21 = arith.constant 0 : index
    %c0_22 = arith.constant 0 : index
    %32 = vector.load %arg13[%c0_21, %c0_22] : memref<16x16xf32, #tpu.memory_space<vmem>>, vector<16x16xf32>
    tpu.vector_store %arg13[%c0_21, %c0_22], %31 {strides = array<i32>} : memref<16x16xf32, #tpu.memory_space<vmem>>, vector<16x16xf32>,
    %c1_i32 = arith.constant 1 : i32
    %33 = arith.cmpi eq, %arg1, %c1_i32 : i32
    %34 = arith.extui %33 : i1 to i32
    %c0_i32_23 = arith.constant 0 : i32
    %35 = arith.cmpi ne, %34, %c0_i32_23 : i32
    scf.if %35 {
      %c0_24 = arith.constant 0 : index
      %c0_25 = arith.constant 0 : index
      %36 = vector.load %arg11[%c0_24, %c0_25] : memref<8x16xf32, #tpu.memory_space<vmem>>, vector<8x16xf32>
      %37 = arith.truncf %36 : vector<8x16xf32> to vector<8x16xbf16>
      %c0_26 = arith.constant 0 : index
      %c0_27 = arith.constant 0 : index
      %38 = vector.load %arg5[%c0_26, %c0_27] : memref<16x16xbf16, #tpu.memory_space<vmem>>, vector<16x16xbf16>
      %cst_28 = arith.constant dense<0.000000e+00> : vector<8x16xf32>
      %39 = tpu.matmul %37, %38, %cst_28 {dimension_numbers = #tpu.dot_dimension_numbers<[1], [0], [0], [1], [0, 0, 1, 1], [], []>} : vector<8x16xbf16>, vector<16x16xbf16>, vector<8x16xf32> -> vector<8x16xf32>
      %c0_29 = arith.constant 0 : index
      %c0_30 = arith.constant 0 : index
      %40 = vector.load %arg6[%c0_29, %c0_30] : memref<1x16xf32, #tpu.memory_space<vmem>>, vector<1x16xf32>
      %41 = vector.broadcast %40 : vector<1x16xf32> to vector<8x16xf32>
      %42 = arith.addf %39, %41 : vector<8x16xf32>
      %43 = arith.addf %42, %36 : vector<8x16xf32>
      %cst_31 = arith.constant 0.000000e+00 : f32
      %44 = vector.broadcast %cst_31 : f32 to vector<8x16xf32>
      %45 = arith.maximumf %43, %44 : vector<8x16xf32>
      %c0_32 = arith.constant 0 : index
      %c0_33 = arith.constant 0 : index
      %46 = vector.load %arg7[%c0_32, %c0_33] : memref<8x8xbf16, #tpu.memory_space<vmem>>, vector<8x8xbf16>
      %47 = arith.truncf %45 : vector<8x16xf32> to vector<8x16xbf16>
      %cst_34 = arith.constant dense<0.000000e+00> : vector<8x16xf32>
      %48 = tpu.matmul %46, %47, %cst_34 {dimension_numbers = #tpu.dot_dimension_numbers<[1], [0], [0], [1], [0, 0, 1, 1], [], []>} : vector<8x8xbf16>, vector<8x16xbf16>, vector<8x16xf32> -> vector<8x16xf32>
      %49 = arith.truncf %48 : vector<8x16xf32> to vector<8x16xbf16>
      %c0_35 = arith.constant 0 : index
      %c0_36 = arith.constant 0 : index
      %c0_37 = arith.constant 0 : index
      %50 = vector.load %arg8[%c0_35, %c0_36, %c0_37] : memref<1x8x16xbf16, #tpu.memory_space<vmem>>, vector<1x8x16xbf16>
      %51 = vector.shape_cast %50 : vector<1x8x16xbf16> to vector<8x16xbf16>
      %52 = vector.shape_cast %49 : vector<8x16xbf16> to vector<1x8x16xbf16>
      tpu.vector_store %arg8[%c0_35, %c0_36, %c0_37], %52 {strides = array<i32>} : memref<1x8x16xbf16, #tpu.memory_space<vmem>>, vector<1x8x16xbf16>,
      %c0_38 = arith.constant 0 : index
      %c0_39 = arith.constant 0 : index
      %53 = vector.load %arg12[%c0_38, %c0_39] : memref<16x1xf32, #tpu.memory_space<vmem>>, vector<16x1xf32>
      %cst_40 = arith.constant dense<0.000000e+00> : vector<8x1xf32>
      %54 = tpu.matmul %48, %53, %cst_40 {dimension_numbers = #tpu.dot_dimension_numbers<[1], [0], [0], [1], [0, 0, 1, 1], [], []>} : vector<8x16xf32>, vector<16x1xf32>, vector<8x1xf32> -> vector<8x1xf32>
      %c0_41 = arith.constant 0 : index
      %c0_42 = arith.constant 0 : index
      %c0_43 = arith.constant 0 : index
      %55 = vector.load %arg9[%c0_41, %c0_42, %c0_43] : memref<1x8x1xf32, #tpu.memory_space<vmem>>, vector<1x8x1xf32>
      %56 = vector.shape_cast %55 : vector<1x8x1xf32> to vector<8x1xf32>
      %57 = vector.shape_cast %54 : vector<8x1xf32> to vector<1x8x1xf32>
      tpu.vector_store %arg9[%c0_41, %c0_42, %c0_43], %57 {strides = array<i32>} : memref<1x8x1xf32, #tpu.memory_space<vmem>>, vector<1x8x1xf32>,
      %c0_44 = arith.constant 0 : index
      %c0_45 = arith.constant 0 : index
      %58 = vector.load %arg13[%c0_44, %c0_45] : memref<16x16xf32, #tpu.memory_space<vmem>>, vector<16x16xf32>
      %cst_46 = arith.constant dense<0.000000e+00> : vector<8x16xf32>
      %59 = tpu.matmul %48, %58, %cst_46 {dimension_numbers = #tpu.dot_dimension_numbers<[1], [0], [0], [1], [0, 0, 1, 1], [], []>} : vector<8x16xf32>, vector<16x16xf32>, vector<8x16xf32> -> vector<8x16xf32>
      %60 = arith.mulf %59, %48 : vector<8x16xf32>
      %cst_47 = arith.constant dense<0.000000e+00> : vector<8xf32>
      %61 = vector.multi_reduction <add>, %60, %cst_47 [1] : vector<8x16xf32> to vector<8xf32>
      %62 = vector.shape_cast %61 : vector<8xf32> to vector<8x1xf32>
      %c0_48 = arith.constant 0 : index
      %c0_49 = arith.constant 0 : index
      %c0_50 = arith.constant 0 : index
      %63 = vector.load %arg10[%c0_48, %c0_49, %c0_50] : memref<1x8x1xf32, #tpu.memory_space<vmem>>, vector<1x8x1xf32>
      %64 = vector.shape_cast %63 : vector<1x8x1xf32> to vector<8x1xf32>
      %65 = vector.shape_cast %62 : vector<8x1xf32> to vector<1x8x1xf32>
      tpu.vector_store %arg10[%c0_48, %c0_49, %c0_50], %65 {strides = array<i32>} : memref<1x8x1xf32, #tpu.memory_space<vmem>>, vector<1x8x1xf32>,
    } else {
    }
    return
  }
  func.func @transform_0(%arg0: i32, %arg1: i32) -> (i32, i32, i32) {
    %c0_i32 = arith.constant 0 : i32
    %c0_i32_0 = arith.constant 0 : i32
    return %arg0, %c0_i32, %arg1 : i32, i32, i32
  }
  func.func @transform_1(%arg0: i32, %arg1: i32) -> (i32, i32) {
    %c0_i32 = arith.constant 0 : i32
    %c0_i32_0 = arith.constant 0 : i32
    %c0_i32_1 = arith.constant 0 : i32
    return %c0_i32, %c0_i32_0 : i32, i32
  }
  func.func @transform_2(%arg0: i32, %arg1: i32) -> (i32, i32) {
    %c0_i32 = arith.constant 0 : i32
    %c0_i32_0 = arith.constant 0 : i32
    %c0_i32_1 = arith.constant 0 : i32
    return %c0_i32, %c0_i32_0 : i32, i32
  }
  func.func @transform_3(%arg0: i32, %arg1: i32) -> (i32, i32) {
    %c0_i32 = arith.constant 0 : i32
    %c0_i32_0 = arith.constant 0 : i32
    %c0_i32_1 = arith.constant 0 : i32
    return %c0_i32, %c0_i32_0 : i32, i32
  }
  func.func @transform_4(%arg0: i32, %arg1: i32) -> (i32, i32) {
    %c0_i32 = arith.constant 0 : i32
    %c0_i32_0 = arith.constant 0 : i32
    %c0_i32_1 = arith.constant 0 : i32
    return %c0_i32, %c0_i32_0 : i32, i32
  }
  func.func @transform_5(%arg0: i32, %arg1: i32) -> (i32, i32) {
    %c0_i32 = arith.constant 0 : i32
    %c0_i32_0 = arith.constant 0 : i32
    %c0_i32_1 = arith.constant 0 : i32
    return %c0_i32, %c0_i32_0 : i32, i32
  }
  func.func @transform_6(%arg0: i32, %arg1: i32) -> (i32, i32, i32) {
    %c0_i32 = arith.constant 0 : i32
    %c0_i32_0 = arith.constant 0 : i32
    %c0_i32_1 = arith.constant 0 : i32
    return %arg0, %c0_i32, %c0_i32_0 : i32, i32, i32
  }
  func.func @transform_7(%arg0: i32, %arg1: i32) -> (i32, i32, i32) {
    %c0_i32 = arith.constant 0 : i32
    %c0_i32_0 = arith.constant 0 : i32
    %c0_i32_1 = arith.constant 0 : i32
    return %arg0, %c0_i32, %c0_i32_0 : i32, i32, i32
  }
  func.func @transform_8(%arg0: i32, %arg1: i32) -> (i32, i32, i32) {
    %c0_i32 = arith.constant 0 : i32
    %c0_i32_0 = arith.constant 0 : i32
    %c0_i32_1 = arith.constant 0 : i32
    return %arg0, %c0_i32, %c0_i32_0 : i32, i32, i32
  }
}

</mosaic_0001>

<llo_original>
// kernel: tpu_custom_call.1
$region0: #{tpu_custom_call.1}
  #allocation0 [shape = 'u32[]', space=smem, size = 0x4, offset = 0x4, fixed_abs, tag = 'smem constant byte address 0x4 - core index']
  #allocation1 [shape = 'u32[144,128]{1,0:T(1,128)}', space=vmem, size = 0x12000, scoped, tag = 'internal scratch']
  #allocation2 [shape = 'f32[8,16]{1,0:T(8,128)}', space=vmem, size = 0x1000, scoped, tag = 'scratch operand']
  #allocation3 [shape = 'f32[16,1]{1,0:T(8,128)}', space=vmem, size = 0x2000, scoped, tag = 'scratch operand']
  #allocation4 [shape = 'f32[16,16]{1,0:T(8,128)}', space=vmem, size = 0x2000, scoped, tag = 'scratch operand']
  %s0 = inlined_call_operand.hbm [shape: f32[2,8,256], index: 0, kind: input, shape index: {}]
  %s1 = inlined_call_operand.vmem [shape: bf16[16,8], index: 1, kind: input, shape index: {}]
  %s2 = inlined_call_operand.vmem [shape: f32[16,1], index: 2, kind: input, shape index: {}]
  %s3 = inlined_call_operand.vmem [shape: bf16[16,16], index: 3, kind: input, shape index: {}]
  %s4 = inlined_call_operand.vmem [shape: f32[1,16], index: 4, kind: input, shape index: {}]
  %s5 = inlined_call_operand.vmem [shape: bf16[8,8], index: 5, kind: input, shape index: {}]
  %s6 = inlined_call_operand.hbm [shape: bf16[2,8,16], index: 6, kind: output, shape index: {0}]
  %s7 = inlined_call_operand.vmem [shape: f32[2,8,1], index: 7, kind: output, shape index: {1}]
  %s8 = inlined_call_operand.vmem [shape: f32[2,8,1], index: 8, kind: output, shape index: {2}]
  %9 = xla_tuple %s6, %s7, %s8
  %s10 = sld [smem:[#allocation0]]
  $region85: #{tpu_custom_call.1} parent=0
    _
  %s12 = ssub.s32 1, %s10
  %s13 = scalar_select 0, %s12, %s10
  $region1: #{tpu_custom_call.1} parent=0
    #allocation5 [shape = 'u8[8192]{0}', space=vmem, size = 0x2000, scoped, tag = 'input window, operand 0']
    #allocation6 [shape = 's32[2]{0}', space=sflag, size = 0x8, scoped, tag = 'scoped memory for tpu_custom_call.1']
    #allocation7 [shape = 's32[2]{0}', space=sflag, size = 0x8, scoped, tag = 'scoped memory for tpu_custom_call.1']
    #allocation8 [shape = 'u8[4096]{0}', space=vmem, size = 0x1000, scoped, tag = 'output window, operand 0']
    %14 = vsyncpa [#allocation6], 0
    %s15 = scalar_lea.sflag [#allocation6], 1
    %16 = vsyncpa %s15, 0
    %17 = vsyncpa [#allocation7], 0
    %s18 = scalar_lea.sflag [#allocation7], 1
    %19 = vsyncpa %s18, 0
    loop: start=0, step=1, limit=6
    $region2: #{tpu_custom_call.1} parent=1 // loop_pre_header
      _
    $region3: #{tpu_custom_call.1} parent=1 // loop_header
      %s21 = sphi 0, %s25
      %p22 = scmp.ge.s32.totalorder %s21, 6
      %s28 = sphi 0, %s40
      %s29 = sphi 0, %s36
      %s30 = sphi 0, %s28
      %s31 = sphi 0, %s29
      %s32 = sphi 0, %s30
      %s33 = sphi 0, %s31
      %s45 = sphi 0, %s47
      %s48 = sphi 0, %s45
      %s49 = sphi 0, %s48
      %s65 = sphi 0, %s49
      %s69 = sphi 0, %s69
      %s71 = sphi 0, %s69
      %s72 = sphi 0, %s71
      %s86 = sphi 0, %s72
      %s90 = sphi 0, %s90
      %s92 = sphi 0, %s90
      %s93 = sphi 0, %s92
      %s107 = sphi 0, %s93
      %s111 = sphi 0, %s111
      %s113 = sphi 0, %s111
      %s114 = sphi 0, %s113
      %s128 = sphi 0, %s114
      %s132 = sphi 0, %s132
      %s134 = sphi 0, %s132
      %s135 = sphi 0, %s134
      %s149 = sphi 0, %s135
      %s153 = sphi 0, %s153
      %s155 = sphi 0, %s153
      %s156 = sphi 0, %s155
      %s170 = sphi 0, %s156
      %s176 = sphi 0, %s178
      %s179 = sphi 0, %s176
      %s180 = sphi 0, %s179
      %s196 = sphi 0, %s180
      %s202 = sphi 0, %s204
      %s205 = sphi 0, %s202
      %s206 = sphi 0, %s205
      %s222 = sphi 0, %s206
      %s228 = sphi 0, %s230
      %s231 = sphi 0, %s228
      %s232 = sphi 0, %s231
      %s248 = sphi 0, %s232
    $region4: #{tpu_custom_call.1} parent=1 // loop_header_branch
      %24 = sbr.rel (%p22) target = $region8
    $region5: #{tpu_custom_call.1} parent=1 // loop_body
      %s26 = ssub.s32 %s21, 1
      %s27 = ssub.s32 %s21, 2
      %s34 = sadd.s32 1, %s29
      %p35 = scmp.ge.s32.totalorder %s34, 2
      %s36 = scalar_select %p35, 0, %s34
      %s37 = sadd.s32 1, %s28
      %s38 = scalar_select %p35, %s37, %s28
      %p39 = scmp.ge.s32.totalorder %s38, 2
      %s40 = scalar_select %p39, 0, %s38
      %s41 = ssub.s32 %s28, %s40
      %s42 = ssub.s32 %s29, %s36
      %s43 = sor.u32 %s41, %s42
      %p44 = scmp.eq.s32.totalorder %s43, 0
      %s46 = sadd.s32 %s45, 1
      %s47 = scalar_select %p44, %s45, %s46
      %p50 = pneg %p44
      %p51 = scmp.eq.s32.totalorder %s21, 3
      %p52 = por %p50, %p51
      %p53 = scmp.ne.s32.totalorder %s45, %s48
      %p54 = scmp.eq.s32.totalorder %s21, 0
      %p55 = por %p53, %p54
      %p56 = scmp.ne.s32.totalorder %s45, %s48
      %p57 = scmp.eq.s32.totalorder %s26, 3
      %p58 = por %p56, %p57
      %p59 = scmp.ne.s32.totalorder %s48, %s49
      %p60 = scmp.eq.s32.totalorder %s26, 0
      %p61 = por %p59, %p60
      %p62 = scmp.ne.s32.totalorder %s48, %s49
      %p63 = scmp.eq.s32.totalorder %s27, 3
      %p64 = por %p62, %p63
      %p66 = scmp.ne.s32.totalorder %s49, %s65
      %p67 = scmp.eq.s32.totalorder %s27, 0
      %p68 = por %p66, %p67
      %s70 = sadd.s32 %s69, 1
      %p73 = scmp.eq.s32.totalorder %s21, 3
      %p74 = scmp.ne.s32.totalorder %s69, %s71
      %p75 = scmp.eq.s32.totalorder %s21, 0
      %p76 = por %p74, %p75
      %p77 = scmp.ne.s32.totalorder %s69, %s71
      %p78 = scmp.eq.s32.totalorder %s26, 3
      %p79 = por %p77, %p78
      %p80 = scmp.ne.s32.totalorder %s71, %s72
      %p81 = scmp.eq.s32.totalorder %s26, 0
      %p82 = por %p80, %p81
      %p83 = scmp.ne.s32.totalorder %s71, %s72
      %p84 = scmp.eq.s32.totalorder %s27, 3
      %p85 = por %p83, %p84
      %p87 = scmp.ne.s32.totalorder %s72, %s86
      %p88 = scmp.eq.s32.totalorder %s27, 0
      %p89 = por %p87, %p88
      %s91 = sadd.s32 %s90, 1
      %p94 = scmp.eq.s32.totalorder %s21, 3
      %p95 = scmp.ne.s32.totalorder %s90, %s92
      %p96 = scmp.eq.s32.totalorder %s21, 0
      %p97 = por %p95, %p96
      %p98 = scmp.ne.s32.totalorder %s90, %s92
      %p99 = scmp.eq.s32.totalorder %s26, 3
      %p100 = por %p98, %p99
      %p101 = scmp.ne.s32.totalorder %s92, %s93
      %p102 = scmp.eq.s32.totalorder %s26, 0
      %p103 = por %p101, %p102
      %p104 = scmp.ne.s32.totalorder %s92, %s93
      %p105 = scmp.eq.s32.totalorder %s27, 3
      %p106 = por %p104, %p105
      %p108 = scmp.ne.s32.totalorder %s93, %s107
      %p109 = scmp.eq.s32.totalorder %s27, 0
      %p110 = por %p108, %p109
      %s112 = sadd.s32 %s111, 1
      %p115 = scmp.eq.s32.totalorder %s21, 3
      %p116 = scmp.ne.s32.totalorder %s111, %s113
      %p117 = scmp.eq.s32.totalorder %s21, 0
      %p118 = por %p116, %p117
      %p119 = scmp.ne.s32.totalorder %s111, %s113
      %p120 = scmp.eq.s32.totalorder %s26, 3
      %p121 = por %p119, %p120
      %p122 = scmp.ne.s32.totalorder %s113, %s114
      %p123 = scmp.eq.s32.totalorder %s26, 0
      %p124 = por %p122, %p123
      %p125 = scmp.ne.s32.totalorder %s113, %s114
      %p126 = scmp.eq.s32.totalorder %s27, 3
      %p127 = por %p125, %p126
      %p129 = scmp.ne.s32.totalorder %s114, %s128
      %p130 = scmp.eq.s32.totalorder %s27, 0
      %p131 = por %p129, %p130
      %s133 = sadd.s32 %s132, 1
      %p136 = scmp.eq.s32.totalorder %s21, 3
      %p137 = scmp.ne.s32.totalorder %s132, %s134
      %p138 = scmp.eq.s32.totalorder %s21, 0
      %p139 = por %p137, %p138
      %p140 = scmp.ne.s32.totalorder %s132, %s134
      %p141 = scmp.eq.s32.totalorder %s26, 3
      %p142 = por %p140, %p141
      %p143 = scmp.ne.s32.totalorder %s134, %s135
      %p144 = scmp.eq.s32.totalorder %s26, 0
      %p145 = por %p143, %p144
      %p146 = scmp.ne.s32.totalorder %s134, %s135
      %p147 = scmp.eq.s32.totalorder %s27, 3
      %p148 = por %p146, %p147
      %p150 = scmp.ne.s32.totalorder %s135, %s149
      %p151 = scmp.eq.s32.totalorder %s27, 0
      %p152 = por %p150, %p151
      %s154 = sadd.s32 %s153, 1
      %p157 = scmp.eq.s32.totalorder %s21, 3
      %p158 = scmp.ne.s32.totalorder %s153, %s155
      %p159 = scmp.eq.s32.totalorder %s21, 0
      %p160 = por %p158, %p159
      %p161 = scmp.ne.s32.totalorder %s153, %s155
      %p162 = scmp.eq.s32.totalorder %s26, 3
      %p163 = por %p161, %p162
      %p164 = scmp.ne.s32.totalorder %s155, %s156
      %p165 = scmp.eq.s32.totalorder %s26, 0
      %p166 = por %p164, %p165
      %p167 = scmp.ne.s32.totalorder %s155, %s156
      %p168 = scmp.eq.s32.totalorder %s27, 3
      %p169 = por %p167, %p168
      %p171 = scmp.ne.s32.totalorder %s156, %s170
      %p172 = scmp.eq.s32.totalorder %s27, 0
      %p173 = por %p171, %p172
      %s174 = ssub.s32 %s28, %s40
      %p175 = scmp.eq.s32.totalorder %s174, 0
      %s177 = sadd.s32 %s176, 1
      %s178 = scalar_select %p175, %s176, %s177
      %p181 = pneg %p175
      %p182 = scmp.eq.s32.totalorder %s21, 3
      %p183 = por %p181, %p182
      %p184 = scmp.ne.s32.totalorder %s176, %s179
      %p185 = scmp.eq.s32.totalorder %s21, 0
      %p186 = por %p184, %p185
      %p187 = scmp.ne.s32.totalorder %s176, %s179
      %p188 = scmp.eq.s32.totalorder %s26, 3
      %p189 = por %p187, %p188
      %p190 = scmp.ne.s32.totalorder %s179, %s180
      %p191 = scmp.eq.s32.totalorder %s26, 0
      %p192 = por %p190, %p191
      %p193 = scmp.ne.s32.totalorder %s179, %s180
      %p194 = scmp.eq.s32.totalorder %s27, 3
      %p195 = por %p193, %p194
      %p197 = scmp.ne.s32.totalorder %s180, %s196
      %p198 = scmp.eq.s32.totalorder %s27, 0
      %p199 = por %p197, %p198
      %s200 = ssub.s32 %s28, %s40
      %p201 = scmp.eq.s32.totalorder %s200, 0
      %s203 = sadd.s32 %s202, 1
      %s204 = scalar_select %p201, %s202, %s203
      %p207 = pneg %p201
      %p208 = scmp.eq.s32.totalorder %s21, 3
      %p209 = por %p207, %p208
      %p210 = scmp.ne.s32.totalorder %s202, %s205
      %p211 = scmp.eq.s32.totalorder %s21, 0
      %p212 = por %p210, %p211
      %p213 = scmp.ne.s32.totalorder %s202, %s205
      %p214 = scmp.eq.s32.totalorder %s26, 3
      %p215 = por %p213, %p214
      %p216 = scmp.ne.s32.totalorder %s205, %s206
      %p217 = scmp.eq.s32.totalorder %s26, 0
      %p218 = por %p216, %p217
      %p219 = scmp.ne.s32.totalorder %s205, %s206
      %p220 = scmp.eq.s32.totalorder %s27, 3
      %p221 = por %p219, %p220
      %p223 = scmp.ne.s32.totalorder %s206, %s222
      %p224 = scmp.eq.s32.totalorder %s27, 0
      %p225 = por %p223, %p224
      %s226 = ssub.s32 %s28, %s40
      %p227 = scmp.eq.s32.totalorder %s226, 0
      %s229 = sadd.s32 %s228, 1
      %s230 = scalar_select %p227, %s228, %s229
      %p233 = pneg %p227
      %p234 = scmp.eq.s32.totalorder %s21, 3
      %p235 = por %p233, %p234
      %p236 = scmp.ne.s32.totalorder %s228, %s231
      %p237 = scmp.eq.s32.totalorder %s21, 0
      %p238 = por %p236, %p237
      %p239 = scmp.ne.s32.totalorder %s228, %s231
      %p240 = scmp.eq.s32.totalorder %s26, 3
      %p241 = por %p239, %p240
      %p242 = scmp.ne.s32.totalorder %s231, %s232
      %p243 = scmp.eq.s32.totalorder %s26, 0
      %p244 = por %p242, %p243
      %p245 = scmp.ne.s32.totalorder %s231, %s232
      %p246 = scmp.eq.s32.totalorder %s27, 3
      %p247 = por %p245, %p246
      %p249 = scmp.ne.s32.totalorder %s232, %s248
      %p250 = scmp.eq.s32.totalorder %s27, 0
      %p251 = por %p249, %p250
      %p252 = scmp.le.s32.totalorder 1, %s21
      %p253 = scmp.lt.s32.totalorder %s21, 5
      %p254 = pnand %p252, %p253
      %p255 = pneg %p254
      // Predicated region
      $region9: #{tpu_custom_call.1} parent=5 // pred_check
        _
      $region10: #{tpu_custom_call.1} parent=5 // pred_check_branch
        %257 = sbr.rel (%p254) target = $region12
      $region11: #{tpu_custom_call.1} parent=5 // pred_region
        %s258 = ssub.s32 %s21, 1
        // Predicated region
        $region13: #{tpu_custom_call.1} parent=11 // pred_check
          %p259 = pneg %p82
        $region14: #{tpu_custom_call.1} parent=11 // pred_check_branch
          %261 = sbr.rel (%p259) target = $region16
        $region15: #{tpu_custom_call.1} parent=11 // pred_region
          _
        $region16: #{tpu_custom_call.1} parent=11 // pred_fallthru
          _
        // Predicated region
        $region17: #{tpu_custom_call.1} parent=11 // pred_check
          %p262 = pneg %p103
        $region18: #{tpu_custom_call.1} parent=11 // pred_check_branch
          %264 = sbr.rel (%p262) target = $region20
        $region19: #{tpu_custom_call.1} parent=11 // pred_region
          _
        $region20: #{tpu_custom_call.1} parent=11 // pred_fallthru
          _
        // Predicated region
        $region21: #{tpu_custom_call.1} parent=11 // pred_check
          %p265 = pneg %p124
        $region22: #{tpu_custom_call.1} parent=11 // pred_check_branch
          %267 = sbr.rel (%p265) target = $region24
        $region23: #{tpu_custom_call.1} parent=11 // pred_region
          _
        $region24: #{tpu_custom_call.1} parent=11 // pred_fallthru
          _
        // Predicated region
        $region25: #{tpu_custom_call.1} parent=11 // pred_check
          %p268 = pneg %p145
        $region26: #{tpu_custom_call.1} parent=11 // pred_check_branch
          %270 = sbr.rel (%p268) target = $region28
        $region27: #{tpu_custom_call.1} parent=11 // pred_region
          _
        $region28: #{tpu_custom_call.1} parent=11 // pred_fallthru
          _
        // Predicated region
        $region29: #{tpu_custom_call.1} parent=11 // pred_check
          %p271 = pneg %p166
        $region30: #{tpu_custom_call.1} parent=11 // pred_check_branch
          %273 = sbr.rel (%p271) target = $region32
        $region31: #{tpu_custom_call.1} parent=11 // pred_region
          _
        $region32: #{tpu_custom_call.1} parent=11 // pred_fallthru
          _
      $region12: #{tpu_custom_call.1} parent=5 // pred_fallthru
        _
      %p274 = scmp.lt.s32.totalorder %s21, 4
      // Predicated region
      $region33: #{tpu_custom_call.1} parent=5 // pred_check
        %p275 = pneg %p274
      $region34: #{tpu_custom_call.1} parent=5 // pred_check_branch
        %277 = sbr.rel (%p275) target = $region36
      $region35: #{tpu_custom_call.1} parent=5 // pred_region
        // Predicated region
        $region37: #{tpu_custom_call.1} parent=35 // pred_check
          %p278 = pneg %p55
        $region38: #{tpu_custom_call.1} parent=35 // pred_check_branch
          %280 = sbr.rel (%p278) target = $region40
        $region39: #{tpu_custom_call.1} parent=35 // pred_region
          %s281 = sand.u32 %s45, 1
          %s282 = scalar_lea.sflag [#allocation6], %s281
          %s283 = sand.u32 %s45, 1
          %s284 = smul.addr %s283, 8
          %s285 = scalar_lea.vmem [#allocation5], %s284
          %s287 = ssub.s32 128, 128
          %288 = vsyncadd %s282, %s287
          %s289 = smul.addr %s28, 2
          %s290 = sadd.s32 %s29, %s289
          %s291 = smul.addr %s290, 128
          %s292 = scalar_lea.hbm %s0, %s291
          %s294 = sshll.u32 %s285, 4
          %s295 = int_to_ptr.vmem [resolvable:$true] %s294
          %297 = dma.hbm_to_vmem [thread:$0]  %s292, 128, %s295, %s282
        $region40: #{tpu_custom_call.1} parent=35 // pred_fallthru
          _
      $region36: #{tpu_custom_call.1} parent=5 // pred_fallthru
        _
      %p298 = scmp.le.s32.totalorder 1, %s21
      %p299 = scmp.lt.s32.totalorder %s21, 5
      %p300 = pnand %p298, %p299
      %p301 = pneg %p300
      // Predicated region
      $region41: #{tpu_custom_call.1} parent=5 // pred_check
        _
      $region42: #{tpu_custom_call.1} parent=5 // pred_check_branch
        %303 = sbr.rel (%p300) target = $region44
      $region43: #{tpu_custom_call.1} parent=5 // pred_region
        %s304 = ssub.s32 %s21, 1
        %s305 = sand.u32 %s48, 1
        %s306 = scalar_lea.sflag [#allocation6], %s305
        %s307 = sand.u32 %s48, 1
        %s308 = smul.addr %s307, 8
        %s309 = scalar_lea.vmem [#allocation5], %s308
        // Predicated region
        $region45: #{tpu_custom_call.1} parent=43 // pred_check
          %p310 = pneg %p61
        $region46: #{tpu_custom_call.1} parent=43 // pred_check_branch
          %312 = sbr.rel (%p310) target = $region48
        $region47: #{tpu_custom_call.1} parent=43 // pred_region
          %313 = dma.done %s306, 128
        $region48: #{tpu_custom_call.1} parent=43 // pred_fallthru
          _
        %s314 = sand.u32 %s48, 1
        %s315 = scalar_lea.sflag [#allocation6], %s314
        %s316 = sand.u32 %s48, 1
        %s317 = smul.addr %s316, 8
        %s318 = scalar_lea.vmem [#allocation5], %s317
        %p319 = pneg %p61
        %p320 = pneg %p58
        %p321 = pneg %p82
        %p322 = pneg %p79
        %p323 = pneg %p103
        %p324 = pneg %p100
        %p325 = pneg %p124
        %p326 = pneg %p121
        %p327 = pneg %p145
        %p328 = pneg %p142
        %p329 = pneg %p166
        %p330 = pneg %p163
        %p331 = pneg %p192
        %p332 = pneg %p189
        %s333 = sand.u32 %s179, 1
        %s334 = scalar_lea.sflag [#allocation7], %s333
        %s335 = sand.u32 %s179, 1
        %s336 = smul.addr %s335, 4
        %s337 = scalar_lea.vmem [#allocation8], %s336
        %p338 = pneg %p218
        %p339 = pneg %p215
        %p340 = scmp.lt.s32.totalorder %s30, 1
        %s341 = scalar_select %p340, %s30, 1
        %s342 = smul.addr %s341, 8
        %s343 = scalar_lea.vmem %s7, %s342
        %p344 = pneg %p244
        %p345 = pneg %p241
        %p346 = scmp.lt.s32.totalorder %s30, 1
        %s347 = scalar_select %p346, %s30, 1
        %s348 = smul.addr %s347, 8
        %s349 = scalar_lea.vmem %s8, %s348
        %p350 = scmp.lt.s32.totalorder %s30, 1
        %s351 = scalar_select %p350, %s30, 1
        %s352 = smul.addr %s351, 8
        %s353 = scalar_lea.vmem %s7, %s352
        %p354 = scmp.lt.s32.totalorder %s30, 1
        %s355 = scalar_select %p354, %s30, 1
        %s356 = smul.addr %s355, 8
        %s357 = scalar_lea.vmem %s8, %s356
        %v359 = vld [vmem:[%s309] sm:$0xff]
        %v360 = vpack.c.bf16 %v359, %v359
        %v361 = vld [vmem:[%s1] sm:$0xf]
        %v362 = vld [vmem:[%s1 + $0x4] sm:$0xf]
        %v363 = vld [vmem:[%s2] sm:$0xff]
        %v364 = vld [vmem:[%s2 + $0x8] sm:$0xff]
        %366 = vset.pattern.permute.xlu0 0
        %367 = vperm.xlu0 %366, %v363
        %v368 = vpop.permute.xlu0 %367
        %371 = vset.pattern.permute.xlu0 0
        %372 = vperm.xlu0 %371, %v364
        %v373 = vpop.permute.xlu0 %372
        %v377 = vunpack.c.l.b16 %v361
        %v378 = vunpack.c.l.b16 %v362
        %v379 = vpack.c.b16 %v378, %v377
        %vm380 = vcmask 64512
        %v382 = vsel %vm380, %v379, 0
        %vm384 = vcmask 1043456
        %v386 = vsel %vm384, %v360, 0
        %388 = vmatprep.subr.bf16.mxu0 0
        %389 = vmatpush1.bf16.msra.mxu0 %v386
        %390 = vmatprep.subr.bf16.mxu0 0
        %391 = vmatpush1.bf16.msra.mxu0 0
        %392 = vmatprep.subr.bf16.mxu0 0
        %393 = vmatpush1.bf16.msra.mxu0 0
        %394 = vmatprep.subr.bf16.mxu0 0
        %395 = vmatpush1.bf16.msra.mxu0 0
        %396 = vmatprep.subr.bf16.mxu0 0
        %397 = vmatpush1.bf16.msra.mxu0 0
        %398 = vmatprep.subr.bf16.mxu0 0
        %399 = vmatpush1.bf16.msra.mxu0 0
        %400 = vmatprep.subr.bf16.mxu0 0
        %401 = vmatpush1.bf16.msra.mxu0 0
        %402 = vmatprep.subr.bf16.mxu0 0
        %403 = vmatpush1.bf16.msra.mxu0 0
        %404 = vmatprep.subr.bf16.mxu0 0
        %405 = vmatpush1.bf16.msra.mxu0 0
        %406 = vmatprep.subr.bf16.mxu0 0
        %407 = vmatpush1.bf16.msra.mxu0 0
        %408 = vmatprep.subr.bf16.mxu0 0
        %409 = vmatpush1.bf16.msra.mxu0 0
        %410 = vmatprep.subr.bf16.mxu0 0
        %411 = vmatpush1.bf16.msra.mxu0 0
        %412 = vmatprep.subr.bf16.mxu0 0
        %413 = vmatpush1.bf16.msra.mxu0 0
        %414 = vmatprep.subr.bf16.mxu0 0
        %415 = vmatpush1.bf16.msra.mxu0 0
        %416 = vmatprep.subr.bf16.mxu0 0
        %417 = vmatpush1.bf16.msra.mxu0 0
        %418 = vmatprep.subr.bf16.mxu0 0
        %419 = vmatpush1.bf16.msra.mxu0 0
        %420 = vmatprep.mubr.bf16.mxu0 0
        %421 = vmatmul.mubr.bf16.gmra.mrb[0].mxu0 %v382
        %v422 = vpop.f32.mrb[0].mxu0
        %v423 = vadd.f32 %v368, %v422
        %v424 = vpop.f32.mrb[0].mxu0
        %v425 = vpop.f32.mrb[0].mxu0
        %v426 = vadd.f32 %v373, %v425
        %v427 = vpop.f32.mrb[0].mxu0
        %428 = vdwg.mxu0
        %v429 = vpack.c.bf16 %v426, %v423
        %430 = vmatprep.subr.bf16.mxu0 0
        %431 = vmatpush1.bf16.xpose.msra.mxu0 %v429
        %432 = vmatprep.subr.bf16.mxu0 0
        %433 = vmatpush1.bf16.xpose.msra.mxu0 0
        %434 = vmatprep.subr.bf16.mxu0 0
        %435 = vmatpush1.bf16.xpose.msra.mxu0 0
        %436 = vmatprep.subr.bf16.mxu0 0
        %437 = vmatpush1.bf16.xpose.msra.mxu0 0
        %438 = vmatprep.subr.bf16.mxu0 0
        %439 = vmatpush1.bf16.xpose.msra.mxu0 0
        %440 = vmatprep.subr.bf16.mxu0 0
        %441 = vmatpush1.bf16.xpose.msra.mxu0 0
        %442 = vmatprep.subr.bf16.mxu0 0
        %443 = vmatpush1.bf16.xpose.msra.mxu0 0
        %444 = vmatprep.subr.bf16.mxu0 0
        %445 = vmatpush1.bf16.xpose.msra.mxu0 0
        %446 = vmatprep.subr.bf16.mxu0 0
        %447 = vmatpush1.bf16.xpose.msra.mxu0 0
        %448 = vmatprep.subr.bf16.mxu0 0
        %449 = vmatpush1.bf16.xpose.msra.mxu0 0
        %450 = vmatprep.subr.bf16.mxu0 0
        %451 = vmatpush1.bf16.xpose.msra.mxu0 0
        %452 = vmatprep.subr.bf16.mxu0 0
        %453 = vmatpush1.bf16.xpose.msra.mxu0 0
        %454 = vmatprep.subr.bf16.mxu0 0
        %455 = vmatpush1.bf16.xpose.msra.mxu0 0
        %456 = vmatprep.subr.bf16.mxu0 0
        %457 = vmatpush1.bf16.xpose.msra.mxu0 0
        %458 = vmatprep.subr.bf16.mxu0 0
        %459 = vmatpush1.bf16.xpose.msra.mxu0 0
        %460 = vmatprep.subr.bf16.mxu0 0
        %461 = vmatpush1.bf16.xpose.msra.mxu0 0
        %462 = vmatprep.mubr.bf16.mxu0 0
        %463 = vmatmul.mubr.bf16.gmra.mrb[0].mxu0 %v360
        %v464 = vpop.f32.mrb[0].mxu0
        %v465 = vadd.f32 0.0, %v464
        %v466 = vpop.f32.mrb[0].mxu0
        %v467 = vpop.f32.mrb[0].mxu0
        %v468 = vpop.f32.mrb[0].mxu0
        %469 = vdwg.mxu0
        %v470 = vlaneseq
        %v471 = vand.u32 %v470, 127
        %s472 = smul.u32 %s31, 128
        %v473 = vstv %s472
        %v474 = vadd.s32 %v471, %v473
        %vm475 = vcmp.lt.s32.totalorder %v474, 192
        %v476 = vsel %vm475, %v423, 0.0
        %v477 = vsel %vm475, %v426, 0.0
        %478 = vadd.xlane.f32.xlu0 %v476
        %v479 = vpop.xlane.xlu0 %478
        %480 = vadd.xlane.f32.xlu0 %v477
        %v481 = vpop.xlane.xlu0 %480
        %482 = vmatprep.subr.mxu0 0.0
        %483 = vmatpush1.xpose.msra.mxu0 %v476
        %484 = vmatprep.subr.mxu0 0.0
        %485 = vmatpush1.xpose.msra.mxu0 %v477
        %486 = vmatprep.subr.mxu0 0.0
        %487 = vmatpush1.xpose.msra.mxu0 0.0
        %488 = vmatprep.subr.mxu0 0.0
        %489 = vmatpush1.xpose.msra.mxu0 0.0
        %490 = vmatprep.subr.mxu0 0.0
        %491 = vmatpush1.xpose.msra.mxu0 0.0
        %492 = vmatprep.subr.mxu0 0.0
        %493 = vmatpush1.xpose.msra.mxu0 0.0
        %494 = vmatprep.subr.mxu0 0.0
        %495 = vmatpush1.xpose.msra.mxu0 0.0
        %496 = vmatprep.subr.mxu0 0.0
        %497 = vmatpush1.xpose.msra.mxu0 0.0
        %498 = vmatprep.subr.mxu0 0.0
        %499 = vmatpush1.xpose.msra.mxu0 0.0
        %500 = vmatprep.subr.mxu0 0.0
        %501 = vmatpush1.xpose.msra.mxu0 0.0
        %502 = vmatprep.subr.mxu0 0.0
        %503 = vmatpush1.xpose.msra.mxu0 0.0
        %504 = vmatprep.subr.mxu0 0.0
        %505 = vmatpush1.xpose.msra.mxu0 0.0
        %506 = vmatprep.subr.mxu0 0.0
        %507 = vmatpush1.xpose.msra.mxu0 0.0
        %508 = vmatprep.subr.mxu0 0.0
        %509 = vmatpush1.xpose.msra.mxu0 0.0
        %510 = vmatprep.subr.mxu0 0.0
        %511 = vmatpush1.xpose.msra.mxu0 0.0
        %512 = vmatprep.subr.mxu0 0.0
        %513 = vmatpush1.xpose.msra.mxu0 0.0
        %514 = vmatprep.subr.mxu0 0.0
        %515 = vmatpush1.xpose.msra.mxu0 0.0
        %516 = vmatprep.subr.mxu0 0.0
        %517 = vmatpush1.xpose.msra.mxu0 0.0
        %518 = vmatprep.subr.mxu0 0.0
        %519 = vmatpush1.xpose.msra.mxu0 0.0
        %520 = vmatprep.subr.mxu0 0.0
        %521 = vmatpush1.xpose.msra.mxu0 0.0
        %522 = vmatprep.subr.mxu0 0.0
        %523 = vmatpush1.xpose.msra.mxu0 0.0
        %524 = vmatprep.subr.mxu0 0.0
        %525 = vmatpush1.xpose.msra.mxu0 0.0
        %526 = vmatprep.subr.mxu0 0.0
        %527 = vmatpush1.xpose.msra.mxu0 0.0
        %528 = vmatprep.subr.mxu0 0.0
        %529 = vmatpush1.xpose.msra.mxu0 0.0
        %530 = vmatprep.subr.mxu0 0.0
        %531 = vmatpush1.xpose.msra.mxu0 0.0
        %532 = vmatprep.subr.mxu0 0.0
        %533 = vmatpush1.xpose.msra.mxu0 0.0
        %534 = vmatprep.subr.mxu0 0.0
        %535 = vmatpush1.xpose.msra.mxu0 0.0
        %536 = vmatprep.subr.mxu0 0.0
        %537 = vmatpush1.xpose.msra.mxu0 0.0
        %538 = vmatprep.subr.mxu0 0.0
        %539 = vmatpush1.xpose.msra.mxu0 0.0
        %540 = vmatprep.subr.mxu0 0.0
        %541 = vmatpush1.xpose.msra.mxu0 0.0
        %542 = vmatprep.subr.mxu0 0.0
        %543 = vmatpush1.xpose.msra.mxu0 0.0
        %544 = vmatprep.subr.mxu0 0.0
        %545 = vmatpush1.xpose.msra.mxu0 0.0
        %546 = vmatprep.mubr.f32.mxu0 0.0
        %547 = vmatmul.mubr.f32.gmra.mrb[0].mxu0 %v476
        %v548 = vpop.f32.mrb[0].mxu0
        %v549 = vadd.f32 0.0, %v548
        %v550 = vpop.f32.mrb[0].mxu0
        %551 = vmatprep.mubr.f32.mxu0 0.0
        %552 = vmatmul.mubr.f32.gmra.mrb[0].mxu0 %v477
        %v553 = vpop.f32.mrb[0].mxu0
        %v554 = vadd.f32 0.0, %v553
        %v555 = vpop.f32.mrb[0].mxu0
        %556 = vdwg.mxu0
        %p557 = scmp.eq.s32.totalorder %s31, 0
        // Predicated region
        $region49: #{tpu_custom_call.1} parent=43 // pred_check
          %p558 = pneg %p557
        $region50: #{tpu_custom_call.1} parent=43 // pred_check_branch
          %560 = sbr.rel (%p558) target = $region52
        $region51: #{tpu_custom_call.1} parent=43 // pred_region
          %vm561 = vcmask 130048
          %562 = vst.msk [vmem:[#allocation2] sm:$0xff] %vm561, 0.0
          %vm563 = vcmask 7168
          %564 = vst.msk [vmem:[#allocation3] sm:$0xff] %vm563, 0.0
          %565 = vst.msk [vmem:[#allocation3 + $0x8] sm:$0xff] %vm563, 0.0
          %566 = vst.msk [vmem:[#allocation4] sm:$0xff] %vm561, 0.0
          %567 = vst.msk [vmem:[#allocation4 + $0x8] sm:$0xff] %vm561, 0.0
        $region52: #{tpu_custom_call.1} parent=43 // pred_fallthru
          _
        %v568 = vld [vmem:[#allocation2] sm:$0xff]
        %v569 = vadd.f32 %v568, %v465
        %vm570 = vcmask 130048
        %571 = vst.msk [vmem:[#allocation2] sm:$0xff] %vm570, %v569
        %v572 = vld [vmem:[#allocation3] sm:$0xff]
        %v573 = vld [vmem:[#allocation3 + $0x8] sm:$0xff]
        %v574 = vadd.f32 %v572, %v479
        %v575 = vadd.f32 %v573, %v481
        %vm576 = vcmask 7168
        %577 = vst.msk [vmem:[#allocation3] sm:$0xff] %vm576, %v574
        %578 = vst.msk [vmem:[#allocation3 + $0x8] sm:$0xff] %vm576, %v575
        %v579 = vld [vmem:[#allocation4] sm:$0xff]
        %v580 = vld [vmem:[#allocation4 + $0x8] sm:$0xff]
        %v581 = vadd.f32 %v579, %v549
        %v582 = vadd.f32 %v580, %v554
        %583 = vst.msk [vmem:[#allocation4] sm:$0xff] %vm570, %v581
        %584 = vst.msk [vmem:[#allocation4 + $0x8] sm:$0xff] %vm570, %v582
        %p585 = scmp.eq.s32.totalorder %s31, 1
        // Predicated region
        $region53: #{tpu_custom_call.1} parent=43 // pred_check
          %p586 = pneg %p585
        $region54: #{tpu_custom_call.1} parent=43 // pred_check_branch
          %588 = sbr.rel (%p586) target = $region56
        $region55: #{tpu_custom_call.1} parent=43 // pred_region
          %v589 = vld [vmem:[#allocation2] sm:$0xff]
          %v590 = vpack.c.bf16 %v589, %v589
          %v591 = vld [vmem:[%s3] sm:$0xf]
          %v592 = vld [vmem:[%s3 + $0x4] sm:$0xf]
          %v593 = vld [vmem:[%s4] sm:$0x1]
          %v595 = vlaneseq
          %v596 = vshrl.u32 %v595, 7
          %v597 = vsub.s32 0, %v596
          %v598 = vrot.slane %v593, %v597
          %v602 = vunpack.c.l.b16 %v591
          %v603 = vunpack.c.l.b16 %v592
          %v604 = vpack.c.b16 %v603, %v602
          %v607 = vsel %vm570, %v590, 0
          %609 = vmatprep.subr.bf16.mxu0 0
          %610 = vmatpush1.bf16.msra.mxu0 %v604
          %611 = vmatprep.subr.bf16.mxu0 0
          %612 = vmatpush1.bf16.msra.mxu0 0
          %613 = vmatprep.subr.bf16.mxu0 0
          %614 = vmatpush1.bf16.msra.mxu0 0
          %615 = vmatprep.subr.bf16.mxu0 0
          %616 = vmatpush1.bf16.msra.mxu0 0
          %617 = vmatprep.subr.bf16.mxu0 0
          %618 = vmatpush1.bf16.msra.mxu0 0
          %619 = vmatprep.subr.bf16.mxu0 0
          %620 = vmatpush1.bf16.msra.mxu0 0
          %621 = vmatprep.subr.bf16.mxu0 0
          %622 = vmatpush1.bf16.msra.mxu0 0
          %623 = vmatprep.subr.bf16.mxu0 0
          %624 = vmatpush1.bf16.msra.mxu0 0
          %625 = vmatprep.subr.bf16.mxu0 0
          %626 = vmatpush1.bf16.msra.mxu0 0
          %627 = vmatprep.subr.bf16.mxu0 0
          %628 = vmatpush1.bf16.msra.mxu0 0
          %629 = vmatprep.subr.bf16.mxu0 0
          %630 = vmatpush1.bf16.msra.mxu0 0
          %631 = vmatprep.subr.bf16.mxu0 0
          %632 = vmatpush1.bf16.msra.mxu0 0
          %633 = vmatprep.subr.bf16.mxu0 0
          %634 = vmatpush1.bf16.msra.mxu0 0
          %635 = vmatprep.subr.bf16.mxu0 0
          %636 = vmatpush1.bf16.msra.mxu0 0
          %637 = vmatprep.subr.bf16.mxu0 0
          %638 = vmatpush1.bf16.msra.mxu0 0
          %639 = vmatprep.subr.bf16.mxu0 0
          %640 = vmatpush1.bf16.msra.mxu0 0
          %641 = vmatprep.mubr.bf16.mxu0 0
          %642 = vmatmul.mubr.bf16.gmra.mrb[0].mxu0 %v607
          %v643 = vpop.f32.mrb[0].mxu0
          %v644 = vadd.f32 %v598, %v643
          %v645 = vpop.f32.mrb[0].mxu0
          %v646 = vpop.f32.mrb[0].mxu0
          %v647 = vpop.f32.mrb[0].mxu0
          %648 = vdwg.mxu0
          %v649 = vadd.f32 %v644, %v589
          %v650 = vmax.f32 %v649, 0.0
          %v651 = vld [vmem:[%s5] sm:$0xf]
          %v652 = vpack.c.bf16 %v650, %v650
          %v654 = vsel %vm380, %v651, 0
          %v657 = vsel %vm384, %v652, 0
          %659 = vmatprep.subr.bf16.mxu0 0
          %660 = vmatpush1.bf16.msra.mxu0 %v657
          %661 = vmatprep.subr.bf16.mxu0 0
          %662 = vmatpush1.bf16.msra.mxu0 0
          %663 = vmatprep.subr.bf16.mxu0 0
          %664 = vmatpush1.bf16.msra.mxu0 0
          %665 = vmatprep.subr.bf16.mxu0 0
          %666 = vmatpush1.bf16.msra.mxu0 0
          %667 = vmatprep.subr.bf16.mxu0 0
          %668 = vmatpush1.bf16.msra.mxu0 0
          %669 = vmatprep.subr.bf16.mxu0 0
          %670 = vmatpush1.bf16.msra.mxu0 0
          %671 = vmatprep.subr.bf16.mxu0 0
          %672 = vmatpush1.bf16.msra.mxu0 0
          %673 = vmatprep.subr.bf16.mxu0 0
          %674 = vmatpush1.bf16.msra.mxu0 0
          %675 = vmatprep.subr.bf16.mxu0 0
          %676 = vmatpush1.bf16.msra.mxu0 0
          %677 = vmatprep.subr.bf16.mxu0 0
          %678 = vmatpush1.bf16.msra.mxu0 0
          %679 = vmatprep.subr.bf16.mxu0 0
          %680 = vmatpush1.bf16.msra.mxu0 0
          %681 = vmatprep.subr.bf16.mxu0 0
          %682 = vmatpush1.bf16.msra.mxu0 0
          %683 = vmatprep.subr.bf16.mxu0 0
          %684 = vmatpush1.bf16.msra.mxu0 0
          %685 = vmatprep.subr.bf16.mxu0 0
          %686 = vmatpush1.bf16.msra.mxu0 0
          %687 = vmatprep.subr.bf16.mxu0 0
          %688 = vmatpush1.bf16.msra.mxu0 0
          %689 = vmatprep.subr.bf16.mxu0 0
          %690 = vmatpush1.bf16.msra.mxu0 0
          %691 = vmatprep.mubr.bf16.mxu0 0
          %692 = vmatmul.mubr.bf16.gmra.mrb[0].mxu0 %v654
          %v693 = vpop.f32.mrb[0].mxu0
          %v694 = vadd.f32 0.0, %v693
          %v695 = vpop.f32.mrb[0].mxu0
          %v696 = vpop.f32.mrb[0].mxu0
          %v697 = vpop.f32.mrb[0].mxu0
          %698 = vdwg.mxu0
          %v699 = vpack.c.bf16 %v694, %v694
          %vm700 = vcmask 125952
          %701 = vst.msk [vmem:[%s337] sm:$0xf] %vm700, %v699
          %v702 = vld [vmem:[#allocation3] sm:$0xff]
          %v703 = vld [vmem:[#allocation3 + $0x8] sm:$0xff]
          %v705 = vsel %vm570, %v694, 0
          %707 = vmatprep.subr.mxu0 0.0
          %708 = vmatpush1.msra.mxu0 %v702
          %709 = vmatprep.subr.mxu0 0.0
          %710 = vmatpush1.msra.mxu0 %v703
          %711 = vmatprep.subr.mxu0 0.0
          %712 = vmatpush1.msra.mxu0 0.0
          %713 = vmatprep.subr.mxu0 0.0
          %714 = vmatpush1.msra.mxu0 0.0
          %715 = vmatprep.subr.mxu0 0.0
          %716 = vmatpush1.msra.mxu0 0.0
          %717 = vmatprep.subr.mxu0 0.0
          %718 = vmatpush1.msra.mxu0 0.0
          %719 = vmatprep.subr.mxu0 0.0
          %720 = vmatpush1.msra.mxu0 0.0
          %721 = vmatprep.subr.mxu0 0.0
          %722 = vmatpush1.msra.mxu0 0.0
          %723 = vmatprep.subr.mxu0 0.0
          %724 = vmatpush1.msra.mxu0 0.0
          %725 = vmatprep.subr.mxu0 0.0
          %726 = vmatpush1.msra.mxu0 0.0
          %727 = vmatprep.subr.mxu0 0.0
          %728 = vmatpush1.msra.mxu0 0.0
          %729 = vmatprep.subr.mxu0 0.0
          %730 = vmatpush1.msra.mxu0 0.0
          %731 = vmatprep.subr.mxu0 0.0
          %732 = vmatpush1.msra.mxu0 0.0
          %733 = vmatprep.subr.mxu0 0.0
          %734 = vmatpush1.msra.mxu0 0.0
          %735 = vmatprep.subr.mxu0 0.0
          %736 = vmatpush1.msra.mxu0 0.0
          %737 = vmatprep.subr.mxu0 0.0
          %738 = vmatpush1.msra.mxu0 0.0
          %739 = vmatprep.subr.mxu0 0.0
          %740 = vmatpush1.msra.mxu0 0.0
          %741 = vmatprep.subr.mxu0 0.0
          %742 = vmatpush1.msra.mxu0 0.0
          %743 = vmatprep.subr.mxu0 0.0
          %744 = vmatpush1.msra.mxu0 0.0
          %745 = vmatprep.subr.mxu0 0.0
          %746 = vmatpush1.msra.mxu0 0.0
          %747 = vmatprep.subr.mxu0 0.0
          %748 = vmatpush1.msra.mxu0 0.0
          %749 = vmatprep.subr.mxu0 0.0
          %750 = vmatpush1.msra.mxu0 0.0
          %751 = vmatprep.subr.mxu0 0.0
          %752 = vmatpush1.msra.mxu0 0.0
          %753 = vmatprep.subr.mxu0 0.0
          %754 = vmatpush1.msra.mxu0 0.0
          %755 = vmatprep.subr.mxu0 0.0
          %756 = vmatpush1.msra.mxu0 0.0
          %757 = vmatprep.subr.mxu0 0.0
          %758 = vmatpush1.msra.mxu0 0.0
          %759 = vmatprep.subr.mxu0 0.0
          %760 = vmatpush1.msra.mxu0 0.0
          %761 = vmatprep.subr.mxu0 0.0
          %762 = vmatpush1.msra.mxu0 0.0
          %763 = vmatprep.subr.mxu0 0.0
          %764 = vmatpush1.msra.mxu0 0.0
          %765 = vmatprep.subr.mxu0 0.0
          %766 = vmatpush1.msra.mxu0 0.0
          %767 = vmatprep.subr.mxu0 0.0
          %768 = vmatpush1.msra.mxu0 0.0
          %769 = vmatprep.subr.mxu0 0.0
          %770 = vmatpush1.msra.mxu0 0.0
          %771 = vmatprep.mubr.f32.mxu0 0.0
          %772 = vmatmul.mubr.f32.gmra.mrb[0].mxu0 %v705
          %v773 = vpop.f32.mrb[0].mxu0
          %v774 = vadd.f32 0.0, %v773
          %v775 = vpop.f32.mrb[0].mxu0
          %776 = vdwg.mxu0
          %777 = vst.msk [vmem:[%s353] sm:$0xff] %vm576, %v774
          %v778 = vld [vmem:[#allocation4] sm:$0xff]
          %v779 = vld [vmem:[#allocation4 + $0x8] sm:$0xff]
          %780 = vmatprep.subr.mxu0 0.0
          %781 = vmatpush1.msra.mxu0 %v778
          %782 = vmatprep.subr.mxu0 0.0
          %783 = vmatpush1.msra.mxu0 %v779
          %784 = vmatprep.subr.mxu0 0.0
          %785 = vmatpush1.msra.mxu0 0.0
          %786 = vmatprep.subr.mxu0 0.0
          %787 = vmatpush1.msra.mxu0 0.0
          %788 = vmatprep.subr.mxu0 0.0
          %789 = vmatpush1.msra.mxu0 0.0
          %790 = vmatprep.subr.mxu0 0.0
          %791 = vmatpush1.msra.mxu0 0.0
          %792 = vmatprep.subr.mxu0 0.0
          %793 = vmatpush1.msra.mxu0 0.0
          %794 = vmatprep.subr.mxu0 0.0
          %795 = vmatpush1.msra.mxu0 0.0
          %796 = vmatprep.subr.mxu0 0.0
          %797 = vmatpush1.msra.mxu0 0.0
          %798 = vmatprep.subr.mxu0 0.0
          %799 = vmatpush1.msra.mxu0 0.0
          %800 = vmatprep.subr.mxu0 0.0
          %801 = vmatpush1.msra.mxu0 0.0
          %802 = vmatprep.subr.mxu0 0.0
          %803 = vmatpush1.msra.mxu0 0.0
          %804 = vmatprep.subr.mxu0 0.0
          %805 = vmatpush1.msra.mxu0 0.0
          %806 = vmatprep.subr.mxu0 0.0
          %807 = vmatpush1.msra.mxu0 0.0
          %808 = vmatprep.subr.mxu0 0.0
          %809 = vmatpush1.msra.mxu0 0.0
          %810 = vmatprep.subr.mxu0 0.0
          %811 = vmatpush1.msra.mxu0 0.0
          %812 = vmatprep.subr.mxu0 0.0
          %813 = vmatpush1.msra.mxu0 0.0
          %814 = vmatprep.subr.mxu0 0.0
          %815 = vmatpush1.msra.mxu0 0.0
          %816 = vmatprep.subr.mxu0 0.0
          %817 = vmatpush1.msra.mxu0 0.0
          %818 = vmatprep.subr.mxu0 0.0
          %819 = vmatpush1.msra.mxu0 0.0
          %820 = vmatprep.subr.mxu0 0.0
          %821 = vmatpush1.msra.mxu0 0.0
          %822 = vmatprep.subr.mxu0 0.0
          %823 = vmatpush1.msra.mxu0 0.0
          %824 = vmatprep.subr.mxu0 0.0
          %825 = vmatpush1.msra.mxu0 0.0
          %826 = vmatprep.subr.mxu0 0.0
          %827 = vmatpush1.msra.mxu0 0.0
          %828 = vmatprep.subr.mxu0 0.0
          %829 = vmatpush1.msra.mxu0 0.0
          %830 = vmatprep.subr.mxu0 0.0
          %831 = vmatpush1.msra.mxu0 0.0
          %832 = vmatprep.subr.mxu0 0.0
          %833 = vmatpush1.msra.mxu0 0.0
          %834 = vmatprep.subr.mxu0 0.0
          %835 = vmatpush1.msra.mxu0 0.0
          %836 = vmatprep.subr.mxu0 0.0
          %837 = vmatpush1.msra.mxu0 0.0
          %838 = vmatprep.subr.mxu0 0.0
          %839 = vmatpush1.msra.mxu0 0.0
          %840 = vmatprep.subr.mxu0 0.0
          %841 = vmatpush1.msra.mxu0 0.0
          %842 = vmatprep.subr.mxu0 0.0
          %843 = vmatpush1.msra.mxu0 0.0
          %844 = vmatprep.mubr.f32.mxu0 0.0
          %845 = vmatmul.mubr.f32.gmra.mrb[0].mxu0 %v705
          %v846 = vpop.f32.mrb[0].mxu0
          %v847 = vadd.f32 0.0, %v846
          %v848 = vpop.f32.mrb[0].mxu0
          %849 = vdwg.mxu0
          %v850 = vmul.f32 %v847, %v694
          %v851 = vsel %vm570, %v850, 0.0
          %852 = vadd.xlane.f32.xlu0 %v851
          %v853 = vpop.xlane.xlu0 %852
          %854 = vst.msk [vmem:[%s357] sm:$0xff] %vm576, %v853
        $region56: #{tpu_custom_call.1} parent=43 // pred_fallthru
          _
        %s855 = sand.u32 %s179, 1
        %s856 = scalar_lea.sflag [#allocation7], %s855
        %s857 = sand.u32 %s179, 1
        %s858 = smul.addr %s857, 4
        %s859 = scalar_lea.vmem [#allocation8], %s858
        %p860 = scmp.lt.s32.totalorder %s30, 1
        %s861 = scalar_select %p860, %s30, 1
        %s862 = smul.addr %s861, 8
        %s863 = scalar_lea.vmem %s7, %s862
        %p864 = scmp.lt.s32.totalorder %s30, 1
        %s865 = scalar_select %p864, %s30, 1
        %s866 = smul.addr %s865, 8
        %s867 = scalar_lea.vmem %s8, %s866
        // Predicated region
        $region57: #{tpu_custom_call.1} parent=43 // pred_check
          %p868 = pneg %p189
        $region58: #{tpu_custom_call.1} parent=43 // pred_check_branch
          %870 = sbr.rel (%p868) target = $region60
        $region59: #{tpu_custom_call.1} parent=43 // pred_region
          %s872 = ssub.s32 64, 64
          %873 = vsyncadd %s856, %s872
          %s874 = smul.addr %s30, 64
          %s875 = scalar_lea.hbm %s6, %s874
          %s877 = sshll.u32 %s859, 4
          %s878 = int_to_ptr.vmem [resolvable:$true] %s877
          %880 = dma.vmem_to_hbm [thread:$0]  %s878, 64, %s875, %s856
        $region60: #{tpu_custom_call.1} parent=43 // pred_fallthru
          _
        // Predicated region
        $region61: #{tpu_custom_call.1} parent=43 // pred_check
          %p881 = pneg %p215
        $region62: #{tpu_custom_call.1} parent=43 // pred_check_branch
          %883 = sbr.rel (%p881) target = $region64
        $region63: #{tpu_custom_call.1} parent=43 // pred_region
          _
        $region64: #{tpu_custom_call.1} parent=43 // pred_fallthru
          _
        // Predicated region
        $region65: #{tpu_custom_call.1} parent=43 // pred_check
          %p884 = pneg %p241
        $region66: #{tpu_custom_call.1} parent=43 // pred_check_branch
          %886 = sbr.rel (%p884) target = $region68
        $region67: #{tpu_custom_call.1} parent=43 // pred_region
          _
        $region68: #{tpu_custom_call.1} parent=43 // pred_fallthru
          _
      $region44: #{tpu_custom_call.1} parent=5 // pred_fallthru
        _
      %p887 = scmp.le.s32.totalorder 2, %s21
      // Predicated region
      $region69: #{tpu_custom_call.1} parent=5 // pred_check
        %p888 = pneg %p887
      $region70: #{tpu_custom_call.1} parent=5 // pred_check_branch
        %890 = sbr.rel (%p888) target = $region72
      $region71: #{tpu_custom_call.1} parent=5 // pred_region
        %s891 = ssub.s32 %s21, 2
        // Predicated region
        $region73: #{tpu_custom_call.1} parent=71 // pred_check
          %p892 = pneg %p195
        $region74: #{tpu_custom_call.1} parent=71 // pred_check_branch
          %894 = sbr.rel (%p892) target = $region76
        $region75: #{tpu_custom_call.1} parent=71 // pred_region
          %s895 = sand.u32 %s180, 1
          %s896 = scalar_lea.sflag [#allocation7], %s895
          %s897 = sand.u32 %s180, 1
          %s898 = smul.addr %s897, 4
          %s899 = scalar_lea.vmem [#allocation8], %s898
          %900 = dma.done %s896, 64
        $region76: #{tpu_custom_call.1} parent=71 // pred_fallthru
          _
        // Predicated region
        $region77: #{tpu_custom_call.1} parent=71 // pred_check
          %p901 = pneg %p221
        $region78: #{tpu_custom_call.1} parent=71 // pred_check_branch
          %903 = sbr.rel (%p901) target = $region80
        $region79: #{tpu_custom_call.1} parent=71 // pred_region
          %p904 = scmp.lt.s32.totalorder %s32, 1
          %s905 = scalar_select %p904, %s32, 1
          %s906 = smul.addr %s905, 8
          %s907 = scalar_lea.vmem %s7, %s906
        $region80: #{tpu_custom_call.1} parent=71 // pred_fallthru
          _
        // Predicated region
        $region81: #{tpu_custom_call.1} parent=71 // pred_check
          %p908 = pneg %p247
        $region82: #{tpu_custom_call.1} parent=71 // pred_check_branch
          %910 = sbr.rel (%p908) target = $region84
        $region83: #{tpu_custom_call.1} parent=71 // pred_region
          %p911 = scmp.lt.s32.totalorder %s32, 1
          %s912 = scalar_select %p911, %s32, 1
          %s913 = smul.addr %s912, 8
          %s914 = scalar_lea.vmem %s8, %s913
        $region84: #{tpu_custom_call.1} parent=71 // pred_fallthru
          _
      $region72: #{tpu_custom_call.1} parent=5 // pred_fallthru
        _
    $region6: #{tpu_custom_call.1} parent=1 // loop_footer
      %s25 = sadd.s32 1, %s21
    $region7: #{tpu_custom_call.1} parent=1 // loop_footer_branch
      %20 = sbr.rel target = $region3
    $region8: #{tpu_custom_call.1} parent=1 // loop_exit
      _
    %915 = vsyncpa [#allocation6], 1
    %s916 = scalar_lea.sflag [#allocation6], 1
    %917 = vsyncpa %s916, 1
    %918 = vsyncpa [#allocation7], 1
    %s919 = scalar_lea.sflag [#allocation7], 1
    %920 = vsyncpa %s919, 1

</llo_original>
